<compile_context>
chip_gen: v6e
topology: v6e:2x2x1
jax: 0.10.0
libtpu: 0.0.40
codegen_flags: <defaults>
</compile_context>

<pallas_src>
import functools

import jax
import jax.numpy as jnp
from jax import lax
from jax.experimental import pallas as pl
from jax.experimental.pallas import tpu as pltpu


def _focal_loss_kernel(x_ref, t_ref, o_ref, acc_ref, *, gamma, n_total,
                       tile_n, num_tiles, num_parts, steps_per_part):
    c = pl.program_id(0)     # partial-sum index (sharded across TCs on v7x)
    i = pl.program_id(1)     # batch-tile index within this partial sum
    tile_idx = c * steps_per_part + i

    @pl.when(i == 0)
    def _():
        acc_ref[...] = jnp.zeros_like(acc_ref)

    def accumulate(mask_rows):
        # Cast in-kernel: inputs stream over HBM at their native width.
        logits = x_ref[...].astype(jnp.float32)          # (TN, C)
        tgt = t_ref[...]                                 # (TN, 1) int32
        if mask_rows:
            row_ids = lax.broadcasted_iota(jnp.int32, (tile_n, 1), 0)
            valid = (tile_idx * tile_n + row_ids) < n_total
            # Mask *before* max/exp: the ragged tail of the DMA'd block is
            # unspecified data (possibly NaN/Inf bit patterns).
            logits = jnp.where(valid, logits, 0.0)
            tgt = jnp.where(valid, tgt, 0)

        # Numerically stable log-softmax CE: ce = logsumexp(x) - x[target]
        m = jnp.max(logits, axis=-1, keepdims=True)
        lse = m + jnp.log(jnp.sum(jnp.exp(logits - m), axis=-1, keepdims=True))
        cls_ids = lax.broadcasted_iota(jnp.int32, logits.shape, 1)
        sel = jnp.sum(jnp.where(cls_ids == tgt, logits, 0.0),
                      axis=-1, keepdims=True)            # logits[n, target[n]]
        ce = jnp.maximum(lse - sel, 0.0)                 # true CE >= 0
        pt = jnp.exp(-ce)
        w = 1.0 - pt

        g = float(gamma)
        if g == int(g) and 0 <= int(g) <= 16:
            # Integer gamma -> repeated VPU multiplies (no pow -> no extra
            # log/exp on the single EUP slot).
            wg = jnp.ones_like(w)
            for _ in range(int(g)):
                wg = wg * w
        else:
            wg = w ** jnp.float32(g)

        contrib = wg * ce              # alpha and the 1/N mean live in wrapper
        if mask_rows:
            contrib = jnp.where(valid, contrib, 0.0)
        acc_ref[...] += contrib        # defer the scalar reduce to epilogue

    ragged = num_tiles * tile_n > n_total              # static
    overflow = num_parts * steps_per_part > num_tiles  # static

    if ragged:
        # Only the boundary tile pays for the row mask; overflow tiles
        # (tile_idx >= num_tiles, possible when num_parts doesn't divide
        # num_tiles) are skipped entirely.
        @pl.when(tile_idx < num_tiles - 1)
        def _():
            accumulate(mask_rows=False)

        @pl.when(tile_idx == num_tiles - 1)
        def _():
            accumulate(mask_rows=True)
    elif overflow:
        @pl.when(tile_idx < num_tiles)
        def _():
            accumulate(mask_rows=False)
    else:
        accumulate(mask_rows=False)

    @pl.when(i == pl.num_programs(1) - 1)
    def _():
        total = jnp.sum(acc_ref[...])                  # partial sum for part c
        o_ref[...] = jnp.broadcast_to(total, o_ref.shape)


def _tpu_vmem_and_cores():
    """Trace-time hardware query with conservative fallbacks."""
    vmem_cap = 64 * 1024 * 1024      # conservative: v7x physical VMEM per TC
    cores = 1
    try:
        info = pltpu.get_tpu_info()
        cap = getattr(info, "vmem_capacity_bytes", None)
        if cap:
            vmem_cap = int(cap)
        for name in ("num_cores", "core_count", "num_tensorcores",
                     "tensorcore_count"):
            val = getattr(info, name, None)
            if val:
                cores = int(val)
                break
    except Exception:
        pass
    return vmem_cap, cores


def _plan(n_rows, c, itemsize, vmem_cap, tile_n=None):
    """Pick (tile_n, vmem_limit_bytes) from a VMEM + per-step HBM budget."""
    sub = max(8, 32 // itemsize)              # sublane alignment per dtype
    c_lanes = ((c + 127) // 128) * 128        # lane padding of the logits blk
    # Per-row VMEM bytes: 2x logits buffers (double-buffered, lane-padded),
    # 2x int32 targets buffers and 1x f32 accumulator — the (tile_n, 1)
    # buffers each occupy a full 128-lane row in VMEM.
    per_row_vmem = 2 * c_lanes * itemsize + 2 * 128 * 4 + 128 * 4
    per_row_hbm = c * itemsize + 4            # bytes actually streamed per row

    if tile_n is None:
        vmem_target = min(int(vmem_cap * 0.7), 48 * 1024 * 1024)
        hbm_step_budget = 12 * 1024 * 1024    # ~12 MiB streamed per grid step
        rows = min(vmem_target // per_row_vmem,
                   hbm_step_budget // per_row_hbm)
        n_up = ((n_rows + sub - 1) // sub) * sub
        rows = min(max(sub, (rows // sub) * sub), max(sub, n_up))
        tile_n = int(rows)

    vmem_need = tile_n * per_row_vmem + (6 << 20)   # + margin (outputs, misc)
    vmem_limit = int(min(vmem_cap, max(vmem_need, 32 << 20)))
    return tile_n, vmem_limit


def focal_loss(logits, targets, *, alpha=1.0, gamma=2.0,
               tile_n=None, num_parts=None):
    """Pallas TPU focal loss. logits: (N, C) float; targets: (N,) int."""
    N, C = logits.shape
    itemsize = jnp.dtype(logits.dtype).itemsize
    sub = max(8, 32 // itemsize)

    tgt2d = targets.astype(jnp.int32).reshape(N, 1)
    n_rows = N
    if N < sub:
        # Tiny-batch safety only: keep blocks >= one sublane tile.
        pad = sub - N
        logits = jnp.pad(logits, ((0, pad), (0, 0)))
        tgt2d = jnp.pad(tgt2d, ((0, pad), (0, 0)))
        n_rows = sub

    vmem_cap, cores = _tpu_vmem_and_cores()
    tile_n, vmem_limit = _plan(n_rows, C, itemsize, vmem_cap, tile_n)

    num_tiles = (n_rows + tile_n - 1) // tile_n
    if num_parts is None:
        num_parts = 2 if (cores >= 2 and num_tiles >= 2) else 1
    num_parts = max(1, min(num_parts, num_tiles))
    steps_per_part = (num_tiles + num_parts - 1) // num_parts

    kernel = functools.partial(
        _focal_loss_kernel, gamma=float(gamma), n_total=N, tile_n=tile_n,
        num_tiles=num_tiles, num_parts=num_parts,
        steps_per_part=steps_per_part)

    def in_map(c, i, _spp=steps_per_part, _nt=num_tiles):
        # Clamp so overflow grid steps never DMA past the array; their
        # contribution is skipped in-kernel.
        return (jnp.minimum(c * _spp + i, _nt - 1), 0)

    partials = pl.pallas_call(
        kernel,
        out_shape=jax.ShapeDtypeStruct((num_parts, 8, 128), jnp.float32),
        grid_spec=pltpu.PrefetchScalarGridSpec(
            num_scalar_prefetch=0,
            grid=(num_parts, steps_per_part),
            in_specs=[
                pl.BlockSpec((tile_n, C), in_map),
                pl.BlockSpec((tile_n, 1), in_map),
            ],
            out_specs=pl.BlockSpec((1, 8, 128), lambda c, i: (c, 0, 0)),
            scratch_shapes=[pltpu.VMEM((tile_n, 1), jnp.float32)],
        ),
        compiler_params=pltpu.CompilerParams(
            dimension_semantics=("parallel", "arbitrary"),
            vmem_limit_bytes=vmem_limit),
    )(logits, tgt2d)

    # Each partial-sum block is broadcast-filled with its scalar; take (0, 0).
    return jnp.float32(alpha) * jnp.sum(partials[:, 0, 0]) / jnp.float32(N)


def _focal_loss_ref(logits, targets, alpha=1.0, gamma=2.0):
    """Pure-JAX reference matching F.cross_entropy(reduction='none') + focal."""
    logp = jax.nn.log_softmax(logits.astype(jnp.float32), axis=-1)
    ce = -jnp.take_along_axis(logp, targets[:, None].astype(jnp.int32),
                              axis=-1)[:, 0]
    pt = jnp.exp(-ce)
    return jnp.mean(alpha * (1.0 - pt) ** gamma * ce)


if __name__ == "__main__":
    key = jax.random.PRNGKey(0)
    k1, k2, k3, k4 = jax.random.split(key, 4)

    # Small shapes implied by the forward: batch N=8 samples, C=32 classes.
    N, C = 8, 32
    logits = jax.random.normal(k1, (N, C), dtype=jnp.float32)
    targets = jax.random.randint(k2, (N,), 0, C, dtype=jnp.int32)

    out = jax.block_until_ready(focal_loss(logits, targets, alpha=1.0, gamma=2.0))
    ref = _focal_loss_ref(logits, targets, alpha=1.0, gamma=2.0)
    assert jnp.allclose(out, ref, rtol=1e-5, atol=1e-5), (out, ref)

    # Second check: bf16 streaming, multi-tile grid, clamped-index/ragged
    # boundary masking, overflow-tile skip, and the two-partial-sum path.
    N2, C2 = 200, 32
    logits2 = jax.random.normal(k3, (N2, C2), dtype=jnp.bfloat16)
    targets2 = jax.random.randint(k4, (N2,), 0, C2, dtype=jnp.int32)
    out2 = jax.block_until_ready(
        focal_loss(logits2, targets2, alpha=0.5, gamma=2.0,
                   tile_n=32, num_parts=2))
    ref2 = _focal_loss_ref(logits2, targets2, alpha=0.5, gamma=2.0)
    assert jnp.allclose(out2, ref2, rtol=1e-4, atol=1e-5), (out2, ref2)

    print("KERNEL_OK")
</pallas_src>

<mosaic_0001>
module attributes {stable_mosaic.version = 11 : i64} {
  func.func @_focal_loss_kernel(%arg0: i32, %arg1: i32, %arg2: memref<8x32xf32, #tpu.memory_space<vmem>>, %arg3: memref<8x1xi32, #tpu.memory_space<vmem>>, %arg4: memref<1x8x128xf32, #tpu.memory_space<vmem>>, %arg5: memref<8x1xf32, #tpu.memory_space<vmem>>) attributes {dimension_semantics = [#tpu.dimension_semantics<parallel>, #tpu.dimension_semantics<arbitrary>], iteration_bounds = array<i64: 1, 1>, scalar_prefetch = 0 : i64, scratch_operands = 1 : i64, tpu.core_type = #tpu.core_type<tc>, window_params = [{transform_indices = @transform_0, window_bounds = array<i64: 8, 32>}, {transform_indices = @transform_1, window_bounds = array<i64: 8, 1>}, {transform_indices = @transform_2, window_bounds = array<i64: 1, 8, 128>}]} {
    %c0_i32 = arith.constant 0 : i32
    %0 = arith.cmpi eq, %arg1, %c0_i32 : i32
    %1 = arith.extui %0 : i1 to i32
    %c0_i32_0 = arith.constant 0 : i32
    %2 = arith.cmpi ne, %1, %c0_i32_0 : i32
    scf.if %2 {
      %cst_17 = arith.constant 0.000000e+00 : f32
      %39 = vector.broadcast %cst_17 : f32 to vector<8x1xf32>
      %c0_18 = arith.constant 0 : index
      %c0_19 = arith.constant 0 : index
      %40 = vector.load %arg5[%c0_18, %c0_19] : memref<8x1xf32, #tpu.memory_space<vmem>>, vector<8x1xf32>
      tpu.vector_store %arg5[%c0_18, %c0_19], %39 {strides = array<i32>} : memref<8x1xf32, #tpu.memory_space<vmem>>, vector<8x1xf32>,
    } else {
    }
    %c0 = arith.constant 0 : index
    %c0_1 = arith.constant 0 : index
    %3 = vector.load %arg2[%c0, %c0_1] : memref<8x32xf32, #tpu.memory_space<vmem>>, vector<8x32xf32>
    %c0_2 = arith.constant 0 : index
    %c0_3 = arith.constant 0 : index
    %4 = vector.load %arg3[%c0_2, %c0_3] : memref<8x1xi32, #tpu.memory_space<vmem>>, vector<8x1xi32>
    %cst = arith.constant dense<0xFF800000> : vector<8xf32>
    %5 = vector.multi_reduction <maximumf>, %3, %cst [1] : vector<8x32xf32> to vector<8xf32>
    %6 = vector.shape_cast %5 : vector<8xf32> to vector<8x1xf32>
    %7 = vector.broadcast %6 : vector<8x1xf32> to vector<8x32xf32>
    %8 = arith.subf %3, %7 : vector<8x32xf32>
    %9 = math.exp %8 : vector<8x32xf32>
    %cst_4 = arith.constant dense<0.000000e+00> : vector<8xf32>
    %10 = vector.multi_reduction <add>, %9, %cst_4 [1] : vector<8x32xf32> to vector<8xf32>
    %11 = vector.shape_cast %10 : vector<8xf32> to vector<8x1xf32>
    %12 = math.log %11 : vector<8x1xf32>
    %13 = arith.addf %6, %12 : vector<8x1xf32>
    %14 = tpu.iota {dimensions = array<i32: 1>} : vector<8x32xi32>
    %15 = vector.broadcast %4 : vector<8x1xi32> to vector<8x32xi32>
    %16 = arith.cmpi eq, %14, %15 : vector<8x32xi32>
    %cst_5 = arith.constant 0.000000e+00 : f32
    %17 = vector.broadcast %cst_5 : f32 to vector<8x32xf32>
    %18 = arith.select %16, %3, %17 : vector<8x32xi1>, vector<8x32xf32>
    %cst_6 = arith.constant dense<0.000000e+00> : vector<8xf32>
    %19 = vector.multi_reduction <add>, %18, %cst_6 [1] : vector<8x32xf32> to vector<8xf32>
    %20 = vector.shape_cast %19 : vector<8xf32> to vector<8x1xf32>
    %21 = arith.subf %13, %20 : vector<8x1xf32>
    %cst_7 = arith.constant 0.000000e+00 : f32
    %22 = vector.broadcast %cst_7 : f32 to vector<8x1xf32>
    %23 = arith.maximumf %21, %22 : vector<8x1xf32>
    %cst_8 = arith.constant 0.000000e+00 : f32
    %24 = vector.broadcast %cst_8 : f32 to vector<8x1xf32>
    %25 = arith.subf %24, %23 : vector<8x1xf32>
    %26 = math.exp %25 : vector<8x1xf32>
    %cst_9 = arith.constant 1.000000e+00 : f32
    %27 = vector.broadcast %cst_9 : f32 to vector<8x1xf32>
    %28 = arith.subf %27, %26 : vector<8x1xf32>
    %cst_10 = arith.constant 1.000000e+00 : f32
    %29 = vector.broadcast %cst_10 : f32 to vector<8x1xf32>
    %30 = arith.mulf %29, %28 : vector<8x1xf32>
    %31 = arith.mulf %30, %28 : vector<8x1xf32>
    %32 = arith.mulf %31, %23 : vector<8x1xf32>
    %c0_11 = arith.constant 0 : index
    %c0_12 = arith.constant 0 : index
    %33 = vector.load %arg5[%c0_11, %c0_12] : memref<8x1xf32, #tpu.memory_space<vmem>>, vector<8x1xf32>
    %34 = arith.addf %33, %32 : vector<8x1xf32>
    %c0_13 = arith.constant 0 : index
    %c0_14 = arith.constant 0 : index
    %35 = vector.load %arg5[%c0_13, %c0_14] : memref<8x1xf32, #tpu.memory_space<vmem>>, vector<8x1xf32>
    tpu.vector_store %arg5[%c0_13, %c0_14], %34 {strides = array<i32>} : memref<8x1xf32, #tpu.memory_space<vmem>>, vector<8x1xf32>,
    %c0_i32_15 = arith.constant 0 : i32
    %36 = arith.cmpi eq, %arg1, %c0_i32_15 : i32
    %37 = arith.extui %36 : i1 to i32
    %c0_i32_16 = arith.constant 0 : i32
    %38 = arith.cmpi ne, %37, %c0_i32_16 : i32
    scf.if %38 {
      %c0_17 = arith.constant 0 : index
      %c0_18 = arith.constant 0 : index
      %39 = vector.load %arg5[%c0_17, %c0_18] : memref<8x1xf32, #tpu.memory_space<vmem>>, vector<8x1xf32>
      %40 = vector.shape_cast %39 : vector<8x1xf32> to vector<1x8x1xf32>
      %cst_19 = arith.constant dense<0.000000e+00> : vector<1xf32>
      %41 = vector.multi_reduction <add>, %40, %cst_19 [1, 2] : vector<1x8x1xf32> to vector<1xf32>
      %42 = vector.shape_cast %41 : vector<1xf32> to vector<1x1x1xf32>
      %43 = vector.extract %42[0, 0, 0] : f32 from vector<1x1x1xf32>
      %44 = vector.broadcast %43 : f32 to vector<1x8x128xf32>
      %c0_20 = arith.constant 0 : index
      %c0_21 = arith.constant 0 : index
      %c0_22 = arith.constant 0 : index
      %45 = vector.load %arg4[%c0_20, %c0_21, %c0_22] : memref<1x8x128xf32, #tpu.memory_space<vmem>>, vector<1x8x128xf32>
      tpu.vector_store %arg4[%c0_20, %c0_21, %c0_22], %44 {strides = array<i32>} : memref<1x8x128xf32, #tpu.memory_space<vmem>>, vector<1x8x128xf32>,
    } else {
    }
    return
  }
  func.func @transform_0(%arg0: i32, %arg1: i32) -> (i32, i32) {
    %c1_i32 = arith.constant 1 : i32
    %0 = arith.muli %arg0, %c1_i32 : i32
    %1 = arith.addi %0, %arg1 : i32
    %c0_i32 = arith.constant 0 : i32
    %2 = arith.minsi %1, %c0_i32 : i32
    %c0_i32_0 = arith.constant 0 : i32
    %c0_i32_1 = arith.constant 0 : i32
    return %2, %c0_i32_0 : i32, i32
  }
  func.func @transform_1(%arg0: i32, %arg1: i32) -> (i32, i32) {
    %c1_i32 = arith.constant 1 : i32
    %0 = arith.muli %arg0, %c1_i32 : i32
    %1 = arith.addi %0, %arg1 : i32
    %c0_i32 = arith.constant 0 : i32
    %2 = arith.minsi %1, %c0_i32 : i32
    %c0_i32_0 = arith.constant 0 : i32
    %c0_i32_1 = arith.constant 0 : i32
    return %2, %c0_i32_0 : i32, i32
  }
  func.func @transform_2(%arg0: i32, %arg1: i32) -> (i32, i32, i32) {
    %c0_i32 = arith.constant 0 : i32
    %c0_i32_0 = arith.constant 0 : i32
    %c0_i32_1 = arith.constant 0 : i32
    return %arg0, %c0_i32, %c0_i32_0 : i32, i32, i32
  }
}

</mosaic_0001>

<llo_original>
// kernel: tpu_custom_call.1
$region0: #{tpu_custom_call.1}
  #allocation0 [shape = 'u32[]', space=smem, size = 0x4, offset = 0x4, fixed_abs, tag = 'smem constant byte address 0x4 - core index']
  #allocation1 [shape = 'u32[144,128]{1,0:T(1,128)}', space=vmem, size = 0x12000, scoped, tag = 'internal scratch']
  #allocation2 [shape = 'f32[8,1]{1,0:T(8,128)}', space=vmem, size = 0x1000, scoped, tag = 'scratch operand']
  %s0 = inlined_call_operand.vmem [shape: f32[8,32], index: 0, kind: input, shape index: {}]
  %s1 = inlined_call_operand.vmem [shape: s32[8,1], index: 1, kind: input, shape index: {}]
  %s2 = inlined_call_operand.hbm [shape: f32[1,8,128], index: 2, kind: output, shape index: {}]
  %s3 = sld [smem:[#allocation0]]
  $region26: #{tpu_custom_call.1} parent=0
    _
  %s5 = ssub.s32 1, %s3
  %s6 = scalar_select 0, %s5, %s3
  $region1: #{tpu_custom_call.1} parent=0
    #allocation3 [shape = 'u8[4096]{0}', space=vmem, size = 0x1000, scoped, tag = 'output window, operand 0, single buffered']
    #allocation4 [shape = 's32[1]{0}', space=sflag, size = 0x4, scoped, tag = 'scoped memory for tpu_custom_call.1']
    %7 = vsyncpa [#allocation4], 0
    // Predicated region
    $region2: #{tpu_custom_call.1} parent=1 // pred_check
      _
    $region3: #{tpu_custom_call.1} parent=1 // pred_check_branch
      %9 = sbr.rel (0) target = $region5
    $region4: #{tpu_custom_call.1} parent=1 // pred_region
      %s10 = sadd.s32 0, 0
      %p11 = scmp.lt.s32.totalorder %s10, 0
      %s12 = scalar_select %p11, %s10, 0
      %p13 = scmp.lt.s32.totalorder %s12, 0
      %s14 = scalar_select %p13, %s12, 0
      %s15 = smul.addr %s14, 8
      %s16 = scalar_lea.vmem %s0, %s15
      %s17 = sadd.s32 0, 0
      %p18 = scmp.lt.s32.totalorder %s17, 0
      %s19 = scalar_select %p18, %s17, 0
    $region5: #{tpu_custom_call.1} parent=1 // pred_fallthru
      _
    // Predicated region
    $region6: #{tpu_custom_call.1} parent=1 // pred_check
      _
    $region7: #{tpu_custom_call.1} parent=1 // pred_check_branch
      %21 = sbr.rel (0) target = $region9
    $region8: #{tpu_custom_call.1} parent=1 // pred_region
      %s22 = sadd.s32 0, 0
      %p23 = scmp.lt.s32.totalorder %s22, 0
      %s24 = scalar_select %p23, %s22, 0
      %p25 = scmp.lt.s32.totalorder %s24, 0
      %s26 = scalar_select %p25, %s24, 0
      %s27 = smul.addr %s26, 8
      %s28 = scalar_lea.vmem %s1, %s27
      %s29 = sadd.s32 0, 0
      %p30 = scmp.lt.s32.totalorder %s29, 0
      %s31 = scalar_select %p30, %s29, 0
    $region9: #{tpu_custom_call.1} parent=1 // pred_fallthru
      _
    %s32 = sadd.s32 0, 0
    %p33 = scmp.lt.s32.totalorder %s32, 0
    %s34 = scalar_select %p33, %s32, 0
    %p35 = scmp.lt.s32.totalorder %s34, 0
    %s36 = scalar_select %p35, %s34, 0
    %s37 = smul.addr %s36, 8
    %s38 = scalar_lea.vmem %s0, %s37
    %s39 = sadd.s32 0, 0
    %p40 = scmp.lt.s32.totalorder %s39, 0
    %s41 = scalar_select %p40, %s39, 0
    %p42 = scmp.lt.s32.totalorder %s41, 0
    %s43 = scalar_select %p42, %s41, 0
    %s44 = smul.addr %s43, 8
    %s45 = scalar_lea.vmem %s1, %s44
    %s46 = sadd.s32 0, 0
    %p47 = scmp.lt.s32.totalorder %s46, 0
    %s48 = scalar_select %p47, %s46, 0
    %p49 = scmp.lt.s32.totalorder %s48, 0
    %s50 = scalar_select %p49, %s48, 0
    %s51 = smul.addr %s50, 8
    %s52 = scalar_lea.vmem %s0, %s51
    %s53 = sadd.s32 0, 0
    %p54 = scmp.lt.s32.totalorder %s53, 0
    %s55 = scalar_select %p54, %s53, 0
    %s56 = sadd.s32 0, 0
    %p57 = scmp.lt.s32.totalorder %s56, 0
    %s58 = scalar_select %p57, %s56, 0
    %p59 = scmp.lt.s32.totalorder %s58, 0
    %s60 = scalar_select %p59, %s58, 0
    %s61 = smul.addr %s60, 8
    %s62 = scalar_lea.vmem %s1, %s61
    %s63 = sadd.s32 0, 0
    %p64 = scmp.lt.s32.totalorder %s63, 0
    %s65 = scalar_select %p64, %s63, 0
    %p66 = scmp.eq.s32.totalorder 0, 0
    // Predicated region
    $region10: #{tpu_custom_call.1} parent=1 // pred_check
      %p67 = pneg %p66
    $region11: #{tpu_custom_call.1} parent=1 // pred_check_branch
      %69 = sbr.rel (%p67) target = $region13
    $region12: #{tpu_custom_call.1} parent=1 // pred_region
      %vm70 = vcmask 7168
      %71 = vst.msk [vmem:[#allocation2] sm:$0xff] %vm70, 0.0
    $region13: #{tpu_custom_call.1} parent=1 // pred_fallthru
      _
    %v72 = vld [vmem:[%s52] sm:$0xff]
    %v73 = vld [vmem:[%s62] sm:$0xff]
    %vm74 = vcmask 261120
    %v75 = vsel %vm74, %v72, -inf
    %76 = vmax.xlane.f32.xlu0 %v75
    %v77 = vpop.xlane.xlu0 %76
    %v78 = vsub.f32 %v72, %v77
    %v79 = vmul.f32 %v78, 1.442695
    %v80 = vpow.pop %v79
    %v81 = vsel %vm74, %v80, 0.0
    %82 = vadd.xlane.f32.xlu0 %v81
    %v83 = vpop.xlane.xlu0 %82
    %v84 = vlog2.pop %v83
    %v85 = vmul.f32 %v84, 0.6931472
    %v86 = vadd.f32 %v77, %v85
    %v87 = vlaneseq
    %v88 = vand.u32 %v87, 127
    %89 = vset.pattern.permute.xlu0 0
    %90 = vperm.xlu0 %89, %v73
    %v91 = vpop.permute.xlu0 %90
    %vm92 = vcmp.eq.s32.totalorder %v88, %v91
    %v93 = vsel %vm92, %v72, 0.0
    %v94 = vsel %vm74, %v93, 0.0
    %95 = vadd.xlane.f32.xlu0 %v94
    %v96 = vpop.xlane.xlu0 %95
    %v97 = vsub.f32 %v86, %v96
    %v98 = vmax.f32 %v97, 0.0
    %v99 = vsub.f32 0.0, %v98
    %v100 = vmul.f32 %v99, 1.442695
    %v101 = vpow.pop %v100
    %v102 = vsub.f32 1.0, %v101
    %v103 = vmul.f32 %v102, %v102
    %v104 = vmul.f32 %v103, %v98
    %v105 = vld [vmem:[#allocation2] sm:$0xff]
    %v106 = vadd.f32 %v105, %v104
    %vm107 = vcmask 7168
    %108 = vst.msk [vmem:[#allocation2] sm:$0xff] %vm107, %v106
    // Predicated region
    $region14: #{tpu_custom_call.1} parent=1 // pred_check
      %p109 = pneg %p66
    $region15: #{tpu_custom_call.1} parent=1 // pred_check_branch
      %111 = sbr.rel (%p109) target = $region17
    $region16: #{tpu_custom_call.1} parent=1 // pred_region
      %v112 = vld [vmem:[#allocation2] sm:$0xff]
      %v113 = vsel %vm107, %v112, 0.0
      %114 = vadd.xlane.f32.xlu0 %v113
      %v115 = vpop.xlane.xlu0 %114
      %v116 = vrot.slane %v115, 4
      %v117 = vadd.f32 %v115, %v116
      %v118 = vrot.slane %v117, 2
      %v119 = vadd.f32 %v117, %v118
      %v120 = vrot.slane %v119, 1
      %v121 = vadd.f32 %v119, %v120
      %s122 = vtos %v121
      %v123 = vstv %s122
      %124 = vst [vmem:[#allocation3] sm:$0xff] %v123
    $region17: #{tpu_custom_call.1} parent=1 // pred_fallthru
      _
    // Predicated region
    $region18: #{tpu_custom_call.1} parent=1 // pred_check
      _
    $region19: #{tpu_custom_call.1} parent=1 // pred_check_branch
      %126 = sbr.rel (0) target = $region21
    $region20: #{tpu_custom_call.1} parent=1 // pred_region
      %s128 = ssub.s32 128, 128
      %129 = vsyncadd [#allocation4], %s128
      %s131 = sshll.u32 [#allocation3], 4
      %s132 = int_to_ptr.vmem [resolvable:$true] %s131
      %134 = dma.vmem_to_hbm [thread:$0]  %s132, 128, %s2, [#allocation4]
    $region21: #{tpu_custom_call.1} parent=1 // pred_fallthru
      _
    // Predicated region
    $region22: #{tpu_custom_call.1} parent=1 // pred_check
      _
    $region23: #{tpu_custom_call.1} parent=1 // pred_check_branch
      %136 = sbr.rel (0) target = $region25
    $region24: #{tpu_custom_call.1} parent=1 // pred_region
      %137 = dma.done [#allocation4], 128
    $region25: #{tpu_custom_call.1} parent=1 // pred_fallthru
      _
    %138 = vsyncpa [#allocation4], 1

</llo_original>
